<compile_context>
chip_gen: v7x
topology: tpu7x:2x2x1
jax: 0.10.0
libtpu: 0.0.40
codegen_flags: <defaults>
</compile_context>

<pallas_src>
import math

import jax
import jax.numpy as jnp
from jax import lax
from jax.experimental import pallas as pl
from jax.experimental.pallas import tpu as pltpu

# Small, module-consistent hyper-parameters for the self-test.
B = 2     # batch
S = 8     # sequence length
H = 32    # hidden_size
I = 64    # intermediate_size

_INV_SQRT2 = 1.0 / math.sqrt(2.0)

# Per-TensorCore VMEM budgets (conservative for v7x's 64 MiB per-TC VMEM,
# comfortably above v5e's 16 MiB / v6e's 32 MiB scoped defaults).
_VMEM_TILE_BUDGET = 40 * 1024 * 1024
_VMEM_LIMIT_BYTES = 48 * 1024 * 1024


def _gelu(x):
    # Exact erf-based GELU, matching the PyTorch module.
    return x * 0.5 * (1.0 + lax.erf(x * _INV_SQRT2))


def bert_intermediate_kernel(x_ref, w_ref, b_ref, o_ref):
    """(tm, H) x (H, I) dense tile + bias + erf-GELU, fully fused.

    x/W may be bf16; the MXU accumulates in f32 (preferred_element_type),
    and bias-add + GELU run on the f32 accumulator before the final cast.
    """
    acc = jnp.dot(x_ref[...], w_ref[...], preferred_element_type=jnp.float32)
    y = acc + b_ref[...].astype(jnp.float32)
    o_ref[...] = _gelu(y).astype(o_ref.dtype)


def _round_up(x, m):
    return (x + m - 1) // m * m


def _vmem_estimate(tm, h_dim, i_dim, in_bytes, out_bytes):
    """Rough per-TC VMEM footprint: resident W + bias, double-buffered x/out."""
    w_bytes = h_dim * i_dim * in_bytes          # resident weight (constant block)
    bias_bytes = i_dim * 4                      # resident f32 bias
    x_bytes = 2 * tm * h_dim * in_bytes         # double-buffered activations
    o_bytes = 2 * tm * i_dim * out_bytes        # double-buffered output tiles
    return w_bytes + bias_bytes + x_bytes + o_bytes


def bert_intermediate(hidden_states, w, b, *, tm_target=512,
                      compute_dtype=jnp.bfloat16):
    """Mirrors BertIntermediate.forward: gelu(dense(hidden_states)).

    hidden_states: (..., H); w: (H, I) (transposed vs torch); b: (1, I).
    compute_dtype: dtype for the matmul inputs (bf16 default; f32 accumulate).
    """
    orig_shape = hidden_states.shape
    h_dim = orig_shape[-1]
    i_dim = w.shape[1]
    out_dtype = hidden_states.dtype

    # Flatten all leading dims into rows: (B, S, H) -> (B*S, H).
    x2 = hidden_states.reshape(-1, h_dim)
    m = x2.shape[0]

    # Cast matmul operands to the compute dtype (bf16 MXU on v6e/v7x); keep
    # the bias in f32 so bias-add + GELU happen on the f32 accumulator.
    x2 = x2.astype(compute_dtype)
    w_c = w.astype(compute_dtype)
    b_f32 = b.astype(jnp.float32)

    in_bytes = jnp.dtype(compute_dtype).itemsize
    out_bytes = jnp.dtype(out_dtype).itemsize
    row_align = 16 if in_bytes == 2 else 8

    # Row tile: as large as tm_target allows, aligned to the sublane packing,
    # shrunk only if the W-resident VMEM budget would be exceeded.
    tm = _round_up(min(m, tm_target), row_align)
    while tm > row_align and _vmem_estimate(tm, h_dim, i_dim, in_bytes,
                                            out_bytes) > _VMEM_TILE_BUDGET:
        tm = max(row_align, _round_up(tm // 2, row_align))

    grid = (pl.cdiv(m, tm),)  # ragged last block is padded, never a tiny tile

    out = pl.pallas_call(
        bert_intermediate_kernel,
        out_shape=jax.ShapeDtypeStruct((m, i_dim), out_dtype),
        grid=grid,
        in_specs=[
            pl.BlockSpec((tm, h_dim), lambda i: (i, 0)),   # activations (streamed)
            pl.BlockSpec((h_dim, i_dim), lambda i: (0, 0)),  # weight (resident)
            pl.BlockSpec((1, i_dim), lambda i: (0, 0)),      # bias (resident)
        ],
        out_specs=pl.BlockSpec((tm, i_dim), lambda i: (i, 0)),
        compiler_params=pltpu.CompilerParams(
            dimension_semantics=("parallel",),
            vmem_limit_bytes=_VMEM_LIMIT_BYTES),
    )(x2, w_c, b_f32)

    return out.reshape(*orig_shape[:-1], i_dim)


if __name__ == "__main__":
    root = jax.random.PRNGKey(0)
    k_x, k_w, k_b = jax.random.split(root, 3)

    hidden_states = jax.random.normal(k_x, (B, S, H), dtype=jnp.float32)
    # NOTE: build_conv_layer(config.linear_cfg, H, I) is assumed to build a
    # standard linear / 1x1 projection: y = x @ W.T + b.  W stored as (in, out).
    w = (0.02 * jax.random.normal(k_w, (H, I))).astype(jnp.float32)
    b = (0.01 * jax.random.normal(k_b, (1, I))).astype(jnp.float32)

    y = bert_intermediate(hidden_states, w, b)
    jax.block_until_ready(y)

    # Reference with matching numerics: bf16 matmul inputs, f32 accumulation,
    # f32 bias + erf-GELU (same as the kernel's compute path).
    x_bf = hidden_states.reshape(-1, H).astype(jnp.bfloat16)
    w_bf = w.astype(jnp.bfloat16)
    ref = jnp.dot(x_bf, w_bf, preferred_element_type=jnp.float32) + b
    ref = ref * 0.5 * (1.0 + lax.erf(ref * _INV_SQRT2))
    ref = ref.astype(hidden_states.dtype).reshape(B, S, I)
    assert jnp.allclose(y, ref, atol=1e-4, rtol=1e-4), "mismatch vs bf16 reference"

    # Loose check against the pure-f32 module semantics (bf16 input rounding only).
    ref32 = hidden_states.reshape(-1, H) @ w + b
    ref32 = ref32 * 0.5 * (1.0 + lax.erf(ref32 * _INV_SQRT2))
    ref32 = ref32.reshape(B, S, I)
    assert jnp.allclose(y, ref32, atol=2e-2, rtol=2e-2), "mismatch vs f32 reference"

    print("KERNEL_OK")
</pallas_src>

<mosaic_0001>
module attributes {stable_mosaic.version = 11 : i64} {
  func.func @bert_intermediate_kernel(%arg0: i32, %arg1: memref<16x32xbf16, #tpu.memory_space<vmem>>, %arg2: memref<32x64xbf16, #tpu.memory_space<vmem>>, %arg3: memref<1x64xf32, #tpu.memory_space<vmem>>, %arg4: memref<16x64xf32, #tpu.memory_space<vmem>>) attributes {dimension_semantics = [#tpu.dimension_semantics<parallel>], iteration_bounds = array<i64: 1>, scalar_prefetch = 0 : i64, scratch_operands = 0 : i64, tpu.core_type = #tpu.core_type<tc>, window_params = [{transform_indices = @transform_0, window_bounds = array<i64: 16, 32>}, {pipeline_mode = #tpu.pipeline_mode<synchronous>, transform_indices = @transform_1, window_bounds = array<i64: 32, 64>}, {pipeline_mode = #tpu.pipeline_mode<synchronous>, transform_indices = @transform_2, window_bounds = array<i64: 1, 64>}, {transform_indices = @transform_3, window_bounds = array<i64: 16, 64>}]} {
    %c0 = arith.constant 0 : index
    %c0_0 = arith.constant 0 : index
    %0 = vector.load %arg1[%c0, %c0_0] : memref<16x32xbf16, #tpu.memory_space<vmem>>, vector<16x32xbf16>
    %c0_1 = arith.constant 0 : index
    %c0_2 = arith.constant 0 : index
    %1 = vector.load %arg2[%c0_1, %c0_2] : memref<32x64xbf16, #tpu.memory_space<vmem>>, vector<32x64xbf16>
    %cst = arith.constant dense<0.000000e+00> : vector<16x64xf32>
    %2 = tpu.matmul %0, %1, %cst {dimension_numbers = #tpu.dot_dimension_numbers<[1], [0], [0], [1], [0, 0, 1, 1], [], []>} : vector<16x32xbf16>, vector<32x64xbf16>, vector<16x64xf32> -> vector<16x64xf32>
    %c0_3 = arith.constant 0 : index
    %c0_4 = arith.constant 0 : index
    %3 = vector.load %arg3[%c0_3, %c0_4] : memref<1x64xf32, #tpu.memory_space<vmem>>, vector<1x64xf32>
    %4 = vector.broadcast %3 : vector<1x64xf32> to vector<16x64xf32>
    %5 = arith.addf %2, %4 : vector<16x64xf32>
    %cst_5 = arith.constant 5.000000e-01 : f32
    %6 = vector.broadcast %cst_5 : f32 to vector<16x64xf32>
    %7 = arith.mulf %5, %6 : vector<16x64xf32>
    %cst_6 = arith.constant 0.707106769 : f32
    %8 = vector.broadcast %cst_6 : f32 to vector<16x64xf32>
    %9 = arith.mulf %5, %8 : vector<16x64xf32>
    %10 = math.erf %9 : vector<16x64xf32>
    %cst_7 = arith.constant 1.000000e+00 : f32
    %11 = vector.broadcast %cst_7 : f32 to vector<16x64xf32>
    %12 = arith.addf %11, %10 : vector<16x64xf32>
    %13 = arith.mulf %7, %12 : vector<16x64xf32>
    %c0_8 = arith.constant 0 : index
    %c0_9 = arith.constant 0 : index
    %14 = vector.load %arg4[%c0_8, %c0_9] : memref<16x64xf32, #tpu.memory_space<vmem>>, vector<16x64xf32>
    tpu.vector_store %arg4[%c0_8, %c0_9], %13 {strides = array<i32>} : memref<16x64xf32, #tpu.memory_space<vmem>>, vector<16x64xf32>,
    return
  }
  func.func @transform_0(%arg0: i32) -> (i32, i32) {
    %c0_i32 = arith.constant 0 : i32
    %c0_i32_0 = arith.constant 0 : i32
    return %arg0, %c0_i32 : i32, i32
  }
  func.func @transform_1(%arg0: i32) -> (i32, i32) {
    %c0_i32 = arith.constant 0 : i32
    %c0_i32_0 = arith.constant 0 : i32
    %c0_i32_1 = arith.constant 0 : i32
    return %c0_i32, %c0_i32_0 : i32, i32
  }
  func.func @transform_2(%arg0: i32) -> (i32, i32) {
    %c0_i32 = arith.constant 0 : i32
    %c0_i32_0 = arith.constant 0 : i32
    %c0_i32_1 = arith.constant 0 : i32
    return %c0_i32, %c0_i32_0 : i32, i32
  }
  func.func @transform_3(%arg0: i32) -> (i32, i32) {
    %c0_i32 = arith.constant 0 : i32
    %c0_i32_0 = arith.constant 0 : i32
    return %arg0, %c0_i32 : i32, i32
  }
}

</mosaic_0001>

<llo_original>
// kernel: tpu_custom_call.1
$region0: #{tpu_custom_call.1}
  #allocation0 [shape = 'u32[]', space=smem, size = 0x4, offset = 0x4, fixed_abs, tag = 'smem constant byte address 0x4 - core index']
  #allocation1 [shape = 'u32[144,128]{1,0:T(1,128)}', space=vmem, size = 0x12000, scoped, tag = 'internal scratch']
  %s0 = inlined_call_operand.hbm [shape: bf16[16,32], index: 0, kind: input, shape index: {}]
  %s1 = inlined_call_operand.hbm [shape: bf16[32,64], index: 1, kind: input, shape index: {}]
  %s2 = inlined_call_operand.vmem [shape: f32[1,64], index: 2, kind: input, shape index: {}]
  %s3 = inlined_call_operand.hbm [shape: f32[16,64], index: 3, kind: output, shape index: {}]
  %s4 = sld [smem:[#allocation0]]
  $region30: #{tpu_custom_call.1} parent=0
    _
  %s6 = ssub.s32 1, %s4
  %s7 = scalar_select 0, %s6, %s4
  $region1: #{tpu_custom_call.1} parent=0
    #allocation2 [shape = 'u8[4096]{0}', space=vmem, size = 0x1000, scoped, tag = 'input window, operand 0, single buffered']
    #allocation3 [shape = 's32[1]{0}', space=sflag, size = 0x4, scoped, tag = 'scoped memory for tpu_custom_call.1']
    #allocation4 [shape = 's32[1]{0}', space=sflag, size = 0x4, scoped, tag = 'scoped memory for tpu_custom_call.1']
    #allocation5 [shape = 'u8[8192]{0}', space=vmem, size = 0x2000, scoped, tag = 'input window, operand 1, single buffered']
    #allocation6 [shape = 's32[1]{0}', space=sflag, size = 0x4, scoped, tag = 'scoped memory for tpu_custom_call.1']
    #allocation7 [shape = 'u8[8192]{0}', space=vmem, size = 0x2000, scoped, tag = 'output window, operand 0, single buffered']
    %8 = vsyncpa [#allocation3], 0
    %9 = vsyncpa [#allocation6], 0
    %10 = vsyncpa [#allocation4], 0
    // Predicated region
    $region2: #{tpu_custom_call.1} parent=1 // pred_check
      _
    $region3: #{tpu_custom_call.1} parent=1 // pred_check_branch
      %12 = sbr.rel (0) target = $region5
    $region4: #{tpu_custom_call.1} parent=1 // pred_region
      %s14 = ssub.s32 128, 128
      %15 = vsyncadd [#allocation3], %s14
      %s16 = sshll.u32 [#allocation2], 4
      %s17 = int_to_ptr.vmem [resolvable:$true] %s16
      %22 = dma.hbm_to_vmem [thread:$0]  %s0, 128, %s17, [#allocation3], 64, 64, 4
    $region5: #{tpu_custom_call.1} parent=1 // pred_fallthru
      _
    // Predicated region
    $region6: #{tpu_custom_call.1} parent=1 // pred_check
      _
    $region7: #{tpu_custom_call.1} parent=1 // pred_check_branch
      %24 = sbr.rel (0) target = $region9
    $region8: #{tpu_custom_call.1} parent=1 // pred_region
      %s26 = ssub.s32 256, 256
      %27 = vsyncadd [#allocation6], %s26
      %s28 = sshll.u32 [#allocation5], 4
      %s29 = int_to_ptr.vmem [resolvable:$true] %s28
      %34 = dma.hbm_to_vmem [thread:$0]  %s1, 256, %s29, [#allocation6], 64, 64, 4
    $region9: #{tpu_custom_call.1} parent=1 // pred_fallthru
      _
    // Predicated region
    $region10: #{tpu_custom_call.1} parent=1 // pred_check
      _
    $region11: #{tpu_custom_call.1} parent=1 // pred_check_branch
      %36 = sbr.rel (0) target = $region13
    $region12: #{tpu_custom_call.1} parent=1 // pred_region
      _
    $region13: #{tpu_custom_call.1} parent=1 // pred_fallthru
      _
    // Predicated region
    $region14: #{tpu_custom_call.1} parent=1 // pred_check
      _
    $region15: #{tpu_custom_call.1} parent=1 // pred_check_branch
      %38 = sbr.rel (0) target = $region17
    $region16: #{tpu_custom_call.1} parent=1 // pred_region
      %39 = dma.done [#allocation3], 128
    $region17: #{tpu_custom_call.1} parent=1 // pred_fallthru
      _
    // Predicated region
    $region18: #{tpu_custom_call.1} parent=1 // pred_check
      _
    $region19: #{tpu_custom_call.1} parent=1 // pred_check_branch
      %41 = sbr.rel (0) target = $region21
    $region20: #{tpu_custom_call.1} parent=1 // pred_region
      %42 = dma.done [#allocation6], 256
    $region21: #{tpu_custom_call.1} parent=1 // pred_fallthru
      _
    %v44 = vld [vmem:[#allocation2] sm:$0xf]
    %v45 = vld [vmem:[#allocation2 + $0x4] sm:$0xf]
    %v46 = vld [vmem:[#allocation5] sm:$0xf]
    %v47 = vld [vmem:[#allocation5 + $0x4] sm:$0xf]
    %v48 = vld [vmem:[#allocation5 + $0x8] sm:$0xf]
    %v49 = vld [vmem:[#allocation5 + $0xc] sm:$0xf]
    %v50 = vld [vmem:[%s2] sm:$0x1]
    %v52 = vlaneseq
    %v53 = vshrl.u32 %v52, 7
    %v54 = vsub.s32 0, %v53
    %v55 = vrot.slane %v50, %v54
    %v59 = vunpack.c.l.b16 %v44
    %v60 = vunpack.c.l.b16 %v45
    %v61 = vpack.c.b16 %v60, %v59
    %v66 = vunpack.c.l.b16 %v46
    %v67 = vunpack.c.l.b16 %v47
    %v68 = vunpack.c.l.b16 %v48
    %v69 = vunpack.c.l.b16 %v49
    %v70 = vpack.c.b16 %v67, %v66
    %v71 = vpack.c.b16 %v69, %v68
    %vm74 = vcmask 261120
    %v76 = vsel %vm74, %v61, 0
    %78 = vmatprep.subr.bf16.mxu0 0
    %79 = vmatpush1.bf16.msra.mxu0 %v70
    %80 = vmatprep.subr.bf16.mxu0 0
    %81 = vmatpush1.bf16.msra.mxu0 %v71
    %82 = vmatprep.subr.bf16.mxu0 0
    %83 = vmatpush1.bf16.msra.mxu0 0
    %84 = vmatprep.subr.bf16.mxu0 0
    %85 = vmatpush1.bf16.msra.mxu0 0
    %86 = vmatprep.subr.bf16.mxu0 0
    %87 = vmatpush1.bf16.msra.mxu0 0
    %88 = vmatprep.subr.bf16.mxu0 0
    %89 = vmatpush1.bf16.msra.mxu0 0
    %90 = vmatprep.subr.bf16.mxu0 0
    %91 = vmatpush1.bf16.msra.mxu0 0
    %92 = vmatprep.subr.bf16.mxu0 0
    %93 = vmatpush1.bf16.msra.mxu0 0
    %94 = vmatprep.subr.bf16.mxu0 0
    %95 = vmatpush1.bf16.msra.mxu0 0
    %96 = vmatprep.subr.bf16.mxu0 0
    %97 = vmatpush1.bf16.msra.mxu0 0
    %98 = vmatprep.subr.bf16.mxu0 0
    %99 = vmatpush1.bf16.msra.mxu0 0
    %100 = vmatprep.subr.bf16.mxu0 0
    %101 = vmatpush1.bf16.msra.mxu0 0
    %102 = vmatprep.subr.bf16.mxu0 0
    %103 = vmatpush1.bf16.msra.mxu0 0
    %104 = vmatprep.subr.bf16.mxu0 0
    %105 = vmatpush1.bf16.msra.mxu0 0
    %106 = vmatprep.subr.bf16.mxu0 0
    %107 = vmatpush1.bf16.msra.mxu0 0
    %108 = vmatprep.subr.bf16.mxu0 0
    %109 = vmatpush1.bf16.msra.mxu0 0
    %110 = vmatprep.mubr.bf16.mxu0 0
    %111 = vmatmul.mubr.bf16.gmra.mrb[0].mxu0 %v76
    %v112 = vpop.f32.mrb[0].mxu0
    %v113 = vadd.f32 %v55, %v112
    %v114 = vpop.f32.mrb[0].mxu0
    %v115 = vpop.f32.mrb[0].mxu0
    %v116 = vadd.f32 %v55, %v115
    %v117 = vpop.f32.mrb[0].mxu0
    %118 = vdwg.mxu0
    %v119 = vmul.f32 %v113, 0.5
    %v120 = vmul.f32 %v116, 0.5
    %v121 = vmul.f32 %v113, 0.70710677
    %v122 = vmul.f32 %v116, 0.70710677
    %v123 = verf.f32.pop %v121
    %v124 = verf.f32.pop %v122
    %v125 = vadd.f32 %v123, 1.0
    %v126 = vadd.f32 %v124, 1.0
    %v127 = vmul.f32 %v119, %v125
    %v128 = vmul.f32 %v120, %v126
    %vm129 = vcmask 523264
    %130 = vst.msk [vmem:[#allocation7] sm:$0xff] %vm129, %v127
    %131 = vst.msk [vmem:[#allocation7 + $0x8] sm:$0xff] %vm129, %v128
    // Predicated region
    $region22: #{tpu_custom_call.1} parent=1 // pred_check
      _
    $region23: #{tpu_custom_call.1} parent=1 // pred_check_branch
      %133 = sbr.rel (0) target = $region25
    $region24: #{tpu_custom_call.1} parent=1 // pred_region
      %s135 = ssub.s32 256, 256
      %136 = vsyncadd [#allocation4], %s135
      %s137 = sshll.u32 [#allocation7], 4
      %s138 = int_to_ptr.vmem [resolvable:$true] %s137
      %143 = dma.vmem_to_hbm [thread:$0]  %s138, 256, %s3, [#allocation4], 128, 128, 8
    $region25: #{tpu_custom_call.1} parent=1 // pred_fallthru
      _
    // Predicated region
    $region26: #{tpu_custom_call.1} parent=1 // pred_check
      _
    $region27: #{tpu_custom_call.1} parent=1 // pred_check_branch
      %145 = sbr.rel (0) target = $region29
    $region28: #{tpu_custom_call.1} parent=1 // pred_region
      %146 = dma.done [#allocation4], 256
    $region29: #{tpu_custom_call.1} parent=1 // pred_fallthru
      _
    %147 = vsyncpa [#allocation3], 1
    %148 = vsyncpa [#allocation6], 1
    %149 = vsyncpa [#allocation4], 1

</llo_original>
